<compile_context>
chip_gen: v7x
topology: tpu7x:2x2x1
jax: 0.10.0
libtpu: 0.0.40
codegen_flags: <defaults>
</compile_context>

<pallas_src>
import functools
import math

import jax
import jax.numpy as jnp
from jax.experimental import pallas as pl
from jax.experimental.pallas import tpu as pltpu

_LANE = 128


def _round_up(x, m):
    return ((x + m - 1) // m) * m


def _vmem_budget_bytes():
    """~70% of the chip's physical VMEM; falls back to a v7x-safe 64 MiB."""
    try:
        cap = int(pltpu.get_tpu_info().vmem_capacity_bytes)
    except Exception:
        cap = 64 * 1024 * 1024
    return int(cap * 7 // 10)


# ---------------------------------------------------------------------------
# Fused path: all three GCN layers in one pallas_call, A+I resident in VMEM
# ---------------------------------------------------------------------------
def _fused_gcn3_kernel(a_hbm, d_ref, z_ref, w_ref, b_ref, o_ref,
                       a_scr, h_scr, *, chunk):
    """grid=(3,): one GCN layer per grid step.

    a_hbm : (Np, Np)    int8  (A+I), raw HBM ref -> copied ONCE into a_scr
    d_ref : (Np, 1)     f32   D^{-1/2} column (zero on padded rows)
    z_ref : (Np, CP)    bf16  padded input features (layer 0 only)
    w_ref : (1, CP, CP) bf16  weight of the current layer
    b_ref : (1, 1, CP)  f32   bias of the current layer
    o_ref : (Np, CP)    f32   padded output (written at the last layer)
    a_scr : (Np, Np)    int8  VMEM-resident (A+I), single-buffered
    h_scr : (Np, CP)    f32   VMEM-resident activations (never hit HBM)
    """
    layer = pl.program_id(0)

    @pl.when(layer == 0)
    def _():
        pltpu.sync_copy(a_hbm, a_scr)                    # A read from HBM once
        h_scr[...] = z_ref[...].astype(jnp.float32)      # H_0 = Z

    # XW = H @ W_l  (bf16 MXU matmul, f32 accumulation), pre-scaled by d.
    xw = jnp.dot(h_scr[...].astype(jnp.bfloat16), w_ref[0],
                 preferred_element_type=jnp.float32)
    xws = (d_ref[...] * xw).astype(jnp.bfloat16)         # (Np, CP) bf16

    n_pad = a_scr.shape[0]
    n_chunks = n_pad // chunk
    b_row = b_ref[0]                                     # (1, CP)

    # Chunked (A+I) @ xws so the int8->bf16 cast temporary stays small.
    @pl.loop(0, n_chunks)
    def _(r):
        r0 = pl.multiple_of(r * chunk, chunk)
        a_blk = a_scr[pl.ds(r0, chunk), :].astype(jnp.bfloat16)
        t = jnp.dot(a_blk, xws, preferred_element_type=jnp.float32)
        h = t * d_ref[pl.ds(r0, chunk), :] + b_row       # fold-out post-scale
        h_scr[pl.ds(r0, chunk), :] = jnp.maximum(h, 0.2 * h)

    @pl.when(layer == pl.num_programs(0) - 1)
    def _():
        o_ref[...] = h_scr[...]


def _decoder_x_fused(a_i8, d, z_pad, w_all, b_all, *, vmem_limit):
    n_pad, cp = z_pad.shape
    chunk = math.gcd(n_pad, 512)
    kernel = functools.partial(_fused_gcn3_kernel, chunk=chunk)
    return pl.pallas_call(
        kernel,
        out_shape=jax.ShapeDtypeStruct((n_pad, cp), jnp.float32),
        grid=(3,),
        in_specs=[
            pl.BlockSpec(memory_space=pl.ANY),                # (A+I) int8, HBM
            pl.BlockSpec((n_pad, 1), lambda l: (0, 0)),       # d
            pl.BlockSpec((n_pad, cp), lambda l: (0, 0)),      # Z (bf16), once
            pl.BlockSpec((1, cp, cp), lambda l: (l, 0, 0)),   # W_l (bf16)
            pl.BlockSpec((1, 1, cp), lambda l: (l, 0, 0)),    # b_l (f32)
        ],
        out_specs=pl.BlockSpec((n_pad, cp), lambda l: (0, 0)),
        scratch_shapes=[pltpu.VMEM((n_pad, n_pad), jnp.int8),
                        pltpu.VMEM((n_pad, cp), jnp.float32)],
        compiler_params=pltpu.CompilerParams(
            dimension_semantics=("arbitrary",),
            vmem_limit_bytes=int(vmem_limit)),
    )(a_i8, d, z_pad, w_all, b_all)


def _fused_vmem_bytes(n_pad, cp, chunk):
    """Conservative VMEM estimate for the fused path (drives auto-selection)."""
    a_scr = n_pad * n_pad                                 # int8 copy of (A+I)
    act = n_pad * cp * (4 + 2 * 2 + 2 * 4 + 4 + 2 + 2)    # h, z x2, out x2, xw, xws, cast
    wts = 2 * (cp * cp * 2 + cp * 4) + 2 * n_pad * 4      # W/b blocks, d blocks
    tmp = chunk * n_pad * 2 + 2 * chunk * cp * 4          # per-chunk temporaries
    return a_scr + act + wts + tmp + (2 << 20)


# ---------------------------------------------------------------------------
# Tiled path (large N): one layer = (A+I)_tile @ XW with K-accumulation
# ---------------------------------------------------------------------------
def _gcn_layer_tiled_kernel(a_ref, xw_ref, d_ref, b_ref, o_ref, acc_ref, *, tk):
    """grid=(rows, K): acc += (A+I)(tm,tk) @ XW(tk,CP); scale+bias+LReLU at last K.

    a_ref : (tm, tk)   int8  (A+I) tile (1 byte/element HBM stream)
    xw_ref: (Np, CP)   bf16  d-pre-scaled XW, VMEM-resident (constant block)
    d_ref : (tm, 1)    f32   D^{-1/2} for this row tile
    b_ref : (1, CP)    f32   bias
    """
    k = pl.program_id(1)

    @pl.when(k == 0)
    def _():
        acc_ref[...] = jnp.zeros_like(acc_ref)

    a_bf = a_ref[...].astype(jnp.bfloat16)
    k0 = pl.multiple_of(k * tk, tk)
    acc_ref[...] += jnp.dot(a_bf, xw_ref[pl.ds(k0, tk), :],
                            preferred_element_type=jnp.float32)

    @pl.when(k == pl.num_programs(1) - 1)
    def _():
        h = acc_ref[...] * d_ref[...] + b_ref[...]     # folded D^{-1/2} + bias
        o_ref[...] = jnp.maximum(h, 0.2 * h)


def _gcn_layer_tiled(a_i8, xws, d, b_row, *, tm, tk, vmem_limit):
    n_pad = a_i8.shape[0]
    cp = xws.shape[1]
    grid = (n_pad // tm, n_pad // tk)
    kernel = functools.partial(_gcn_layer_tiled_kernel, tk=tk)
    return pl.pallas_call(
        kernel,
        out_shape=jax.ShapeDtypeStruct((n_pad, cp), jnp.float32),
        grid=grid,
        in_specs=[
            pl.BlockSpec((tm, tk), lambda m, k: (m, k)),      # (A+I) int8 tile
            pl.BlockSpec((n_pad, cp), lambda m, k: (0, 0)),   # XW, VMEM-resident
            pl.BlockSpec((tm, 1), lambda m, k: (m, 0)),       # d row tile
            pl.BlockSpec((1, cp), lambda m, k: (0, 0)),       # bias (constant)
        ],
        out_specs=pl.BlockSpec((tm, cp), lambda m, k: (m, 0)),
        scratch_shapes=[pltpu.VMEM((tm, cp), jnp.float32)],
        compiler_params=pltpu.CompilerParams(
            dimension_semantics=("parallel", "arbitrary"),    # rows across TCs
            vmem_limit_bytes=int(vmem_limit)),
    )(a_i8, xws, d, b_row)


# ---------------------------------------------------------------------------
# Glue: adjacency prep, parameter packing, forward pass
# ---------------------------------------------------------------------------
def _prep_adjacency(adj, n_pad):
    """Single fused producer of padded int8 (A+I) and padded D^{-1/2} column."""
    n = adj.shape[0]
    deg = jnp.sum(adj.astype(jnp.float32), axis=1) + 1.0        # A+I degrees >= 1
    d = jnp.pad(jax.lax.rsqrt(deg), (0, n_pad - n))[:, None]    # zero on pad rows
    a_i8 = jnp.pad(adj.astype(jnp.int8) + jnp.eye(n, dtype=jnp.int8),
                   ((0, n_pad - n), (0, n_pad - n)))
    return a_i8, d.astype(jnp.float32)


def _pack_params(params, cp):
    """Zero-pad the three (W, b) pairs to (CP, CP)/(CP,); W in bf16, b in f32."""
    ws, bs = [], []
    for i in (1, 2, 3):
        w = params[f"w{i}"].astype(jnp.bfloat16)
        b = params[f"b{i}"].astype(jnp.float32)
        ws.append(jnp.pad(w, ((0, cp - w.shape[0]), (0, cp - w.shape[1]))))
        bs.append(jnp.pad(b, (0, cp - b.shape[0])))
    return jnp.stack(ws), jnp.stack(bs)[:, None, :]   # (3,CP,CP) bf16, (3,1,CP) f32


def decoder_x_forward(params, Z, Adj, *, fuse_max_nodes=None, tm=1024, tk=1024):
    """Forward pass of Decoder_X: three (GCNConv -> LeakyReLU(0.2)) layers."""
    n, latent_c = Z.shape
    out_c = params["w3"].shape[1]
    cp = _round_up(max(latent_c, params["w1"].shape[1],
                       params["w2"].shape[1], out_c), _LANE)
    w_all, b_all = _pack_params(params, cp)
    budget = _vmem_budget_bytes()
    n_pad128 = _round_up(n, _LANE)

    if fuse_max_nodes is None:
        chunk = math.gcd(n_pad128, 512)
        use_fused = _fused_vmem_bytes(n_pad128, cp, chunk) <= budget
    else:
        use_fused = n <= fuse_max_nodes

    if use_fused:
        # A-resident path: A read from HBM once (int8), activations stay in VMEM.
        n_pad = n_pad128
        a_i8, d = _prep_adjacency(Adj, n_pad)
        z_pad = jnp.pad(Z.astype(jnp.bfloat16),
                        ((0, n_pad - n), (0, cp - latent_c)))
        out = _decoder_x_fused(a_i8, d, z_pad, w_all, b_all, vmem_limit=budget)
    else:
        # Tiled path: per-layer (rows, K) grid, int8 A stream, f32 accumulator.
        tm = min(tm, n_pad128)
        tk = min(tk, n_pad128)
        if tm % _LANE or tk % _LANE:
            raise ValueError("tm and tk must be multiples of 128")
        n_pad = _round_up(n, math.lcm(tm, tk))
        a_i8, d = _prep_adjacency(Adj, n_pad)
        h = jnp.pad(Z.astype(jnp.float32), ((0, n_pad - n), (0, cp - latent_c)))
        for l in range(3):
            # XW hoisted to plain JAX (tiny Npad x 128 bf16 matmul, once/layer),
            # pre-scaled by d so the kernel streams the exact int8 (A+I).
            xw = jnp.dot(h.astype(jnp.bfloat16), w_all[l],
                         preferred_element_type=jnp.float32)
            xws = (d * xw).astype(jnp.bfloat16)
            h = _gcn_layer_tiled(a_i8, xws, d, b_all[l],
                                 tm=tm, tk=tk, vmem_limit=budget)
        out = h
    return out[:n, :out_c]


def decoder_x_reference(params, Z, Adj):
    """Pure-JAX reference with the same bf16 quantization / folding as the kernels."""
    n = Z.shape[0]
    deg = jnp.sum(Adj.astype(jnp.float32), axis=1) + 1.0
    d = jax.lax.rsqrt(deg)[:, None]
    a_hat = (Adj.astype(jnp.float32) + jnp.eye(n, dtype=jnp.float32)).astype(jnp.bfloat16)
    h = Z.astype(jnp.float32)
    for i in (1, 2, 3):
        w = params[f"w{i}"].astype(jnp.bfloat16)
        b = params[f"b{i}"].astype(jnp.float32)
        xw = jnp.dot(h.astype(jnp.bfloat16), w, preferred_element_type=jnp.float32)
        xws = (d * xw).astype(jnp.bfloat16)
        t = jnp.dot(a_hat, xws, preferred_element_type=jnp.float32)
        h = t * d + b[None, :]
        h = jnp.maximum(h, 0.2 * h)
    return h


def glorot(key, shape):
    fan_in, fan_out = shape
    limit = jnp.sqrt(6.0 / (fan_in + fan_out))
    return jax.random.uniform(key, shape, jnp.float32, -limit, limit)


def init_decoder_x_params(key, latent_c, h1_c, h2_c, out_c):
    # GCNConv zero-inits biases; small random biases exercise the bias path.
    ks = jax.random.split(key, 6)
    return {
        "w1": glorot(ks[0], (latent_c, h1_c)),
        "b1": 0.1 * jax.random.normal(ks[1], (h1_c,), jnp.float32),
        "w2": glorot(ks[2], (h1_c, h2_c)),
        "b2": 0.1 * jax.random.normal(ks[3], (h2_c,), jnp.float32),
        "w3": glorot(ks[4], (h2_c, out_c)),
        "b3": 0.1 * jax.random.normal(ks[5], (out_c,), jnp.float32),
    }


if __name__ == "__main__":
    LATENT, H1, H2, OUT = 32, 24, 16, 8
    key = jax.random.PRNGKey(0)
    k_p, k_g1, k_g2, k_g3 = jax.random.split(key, 4)
    params = init_decoder_x_params(k_p, LATENT, H1, H2, OUT)

    def make_graph(k, n):
        kz, ka = jax.random.split(k)
        Z = jax.random.normal(kz, (n, LATENT), jnp.float32)
        a_rand = jax.random.uniform(ka, (n, n))
        adj = jnp.triu((a_rand > 0.9).astype(jnp.float32), 1)
        return Z, adj + adj.T            # symmetric 0/1 adjacency, no self-loops

    def check(out, ref, n):
        assert out.shape == (n, OUT)
        assert bool(jnp.all(jnp.isfinite(out)))
        assert bool(jnp.allclose(out, ref, rtol=5e-2, atol=5e-2))

    # ---- small graph -> fused (A-resident, single pallas_call) path ----
    Z1, A1 = make_graph(k_g1, 64)
    out1 = jax.block_until_ready(decoder_x_forward(params, Z1, A1))
    check(out1, decoder_x_reference(params, Z1, A1), 64)

    # ---- non-multiple-of-128 graph forced onto the (rows, K)-tiled path ----
    Z2, A2 = make_graph(k_g2, 500)
    out2 = jax.block_until_ready(
        decoder_x_forward(params, Z2, A2, fuse_max_nodes=0, tm=128, tk=128))
    check(out2, decoder_x_reference(params, Z2, A2), 500)

    # ---- mid-size graph -> fused path with multiple row chunks per layer ----
    Z3, A3 = make_graph(k_g3, 600)
    out3 = jax.block_until_ready(decoder_x_forward(params, Z3, A3))
    check(out3, decoder_x_reference(params, Z3, A3), 600)

    print("KERNEL_OK")
</pallas_src>

<mosaic_0001>
module attributes {stable_mosaic.version = 11 : i64} {
  func.func @_fused_gcn3_kernel(%arg0: i32, %arg1: memref<128x128xi8, #tpu.memory_space<any>>, %arg2: memref<128x1xf32, #tpu.memory_space<vmem>>, %arg3: memref<128x128xbf16, #tpu.memory_space<vmem>>, %arg4: memref<1x128x128xbf16, #tpu.memory_space<vmem>>, %arg5: memref<1x1x128xf32, #tpu.memory_space<vmem>>, %arg6: memref<128x128xf32, #tpu.memory_space<vmem>>, %arg7: memref<128x128xi8, #tpu.memory_space<vmem>>, %arg8: memref<128x128xf32, #tpu.memory_space<vmem>>) attributes {dimension_semantics = [#tpu.dimension_semantics<arbitrary>], iteration_bounds = array<i64: 3>, scalar_prefetch = 0 : i64, scratch_operands = 2 : i64, tpu.core_type = #tpu.core_type<tc>, window_params = [{}, {pipeline_mode = #tpu.pipeline_mode<synchronous>, transform_indices = @transform_1, window_bounds = array<i64: 128, 1>}, {pipeline_mode = #tpu.pipeline_mode<synchronous>, transform_indices = @transform_2, window_bounds = array<i64: 128, 128>}, {transform_indices = @transform_3, window_bounds = array<i64: 1, 128, 128>}, {transform_indices = @transform_4, window_bounds = array<i64: 1, 1, 128>}, {pipeline_mode = #tpu.pipeline_mode<synchronous>, transform_indices = @transform_5, window_bounds = array<i64: 128, 128>}]} {
    %c0_i32 = arith.constant 0 : i32
    %0 = arith.cmpi eq, %arg0, %c0_i32 : i32
    %1 = arith.extui %0 : i1 to i32
    %c0_i32_0 = arith.constant 0 : i32
    %2 = arith.cmpi ne, %1, %c0_i32_0 : i32
    scf.if %2 {
      "tpu.region"() ({
        %39 = tpu.sem_alloc : memref<!tpu.dma_semaphore, #tpu.memory_space<semaphore_mem>>
        tpu.enqueue_dma source(%arg1 : memref<128x128xi8, #tpu.memory_space<any>>) target(%arg7 : memref<128x128xi8, #tpu.memory_space<vmem>>) target_semaphore(%39 : memref<!tpu.dma_semaphore, #tpu.memory_space<semaphore_mem>>)
        tpu.wait_dma2 semaphore(%39 : memref<!tpu.dma_semaphore, #tpu.memory_space<semaphore_mem>>) src(%arg1 : memref<128x128xi8, #tpu.memory_space<any>>) dst(%arg7 : memref<128x128xi8, #tpu.memory_space<vmem>>)
        tpu.yield
      }) : () -> ()
      %c0_19 = arith.constant 0 : index
      %c0_20 = arith.constant 0 : index
      %36 = vector.load %arg3[%c0_19, %c0_20] : memref<128x128xbf16, #tpu.memory_space<vmem>>, vector<128x128xbf16>
      %37 = arith.extf %36 : vector<128x128xbf16> to vector<128x128xf32>
      %c0_21 = arith.constant 0 : index
      %c0_22 = arith.constant 0 : index
      %38 = vector.load %arg8[%c0_21, %c0_22] : memref<128x128xf32, #tpu.memory_space<vmem>>, vector<128x128xf32>
      tpu.vector_store %arg8[%c0_21, %c0_22], %37 {strides = array<i32>} : memref<128x128xf32, #tpu.memory_space<vmem>>, vector<128x128xf32>,
    } else {
    }
    %c0 = arith.constant 0 : index
    %c0_1 = arith.constant 0 : index
    %3 = vector.load %arg8[%c0, %c0_1] : memref<128x128xf32, #tpu.memory_space<vmem>>, vector<128x128xf32>
    %4 = arith.truncf %3 : vector<128x128xf32> to vector<128x128xbf16>
    %c0_2 = arith.constant 0 : index
    %c0_3 = arith.constant 0 : index
    %c0_4 = arith.constant 0 : index
    %5 = vector.load %arg4[%c0_2, %c0_3, %c0_4] : memref<1x128x128xbf16, #tpu.memory_space<vmem>>, vector<1x128x128xbf16>
    %6 = vector.shape_cast %5 : vector<1x128x128xbf16> to vector<128x128xbf16>
    %cst = arith.constant dense<0.000000e+00> : vector<128x128xf32>
    %7 = tpu.matmul %4, %6, %cst {dimension_numbers = #tpu.dot_dimension_numbers<[1], [0], [0], [1], [0, 0, 1, 1], [], []>} : vector<128x128xbf16>, vector<128x128xbf16>, vector<128x128xf32> -> vector<128x128xf32>
    %c0_5 = arith.constant 0 : index
    %c0_6 = arith.constant 0 : index
    %8 = vector.load %arg2[%c0_5, %c0_6] : memref<128x1xf32, #tpu.memory_space<vmem>>, vector<128x1xf32>
    %9 = vector.broadcast %8 : vector<128x1xf32> to vector<128x128xf32>
    %10 = arith.mulf %9, %7 : vector<128x128xf32>
    %11 = arith.truncf %10 : vector<128x128xf32> to vector<128x128xbf16>
    %c0_7 = arith.constant 0 : index
    %c0_8 = arith.constant 0 : index
    %c0_9 = arith.constant 0 : index
    %12 = vector.load %arg5[%c0_7, %c0_8, %c0_9] : memref<1x1x128xf32, #tpu.memory_space<vmem>>, vector<1x1x128xf32>
    %13 = vector.shape_cast %12 : vector<1x1x128xf32> to vector<1x128xf32>
    %c0_i32_10 = arith.constant 0 : i32
    %c1_i32 = arith.constant 1 : i32
    %14 = arith.muli %c0_i32_10, %c1_i32 : i32
    %c0_i32_11 = arith.constant 0 : i32
    %15 = arith.addi %c0_i32_11, %14 : i32
    %c128_i32 = arith.constant 128 : i32
    %16 = arith.muli %15, %c128_i32 : i32
    %17 = tpu.assume_multiple %16, 128 : i32
    %18 = arith.index_cast %17 : i32 to index
    %c0_12 = arith.constant 0 : index
    %19 = vector.load %arg7[%18, %c0_12] : memref<128x128xi8, #tpu.memory_space<vmem>>, vector<128x128xi8>
    %20 = arith.sitofp %19 : vector<128x128xi8> to vector<128x128xbf16>
    %cst_13 = arith.constant dense<0.000000e+00> : vector<128x128xf32>
    %21 = tpu.matmul %20, %11, %cst_13 {dimension_numbers = #tpu.dot_dimension_numbers<[1], [0], [0], [1], [0, 0, 1, 1], [], []>} : vector<128x128xbf16>, vector<128x128xbf16>, vector<128x128xf32> -> vector<128x128xf32>
    %22 = arith.index_cast %17 : i32 to index
    %c0_14 = arith.constant 0 : index
    %23 = vector.load %arg2[%22, %c0_14] : memref<128x1xf32, #tpu.memory_space<vmem>>, vector<128x1xf32>
    %24 = vector.broadcast %23 : vector<128x1xf32> to vector<128x128xf32>
    %25 = arith.mulf %21, %24 : vector<128x128xf32>
    %26 = vector.broadcast %13 : vector<1x128xf32> to vector<128x128xf32>
    %27 = arith.addf %25, %26 : vector<128x128xf32>
    %cst_15 = arith.constant 2.000000e-01 : f32
    %28 = vector.broadcast %cst_15 : f32 to vector<128x128xf32>
    %29 = arith.mulf %28, %27 : vector<128x128xf32>
    %30 = arith.maximumf %27, %29 : vector<128x128xf32>
    %31 = arith.index_cast %17 : i32 to index
    %c0_16 = arith.constant 0 : index
    %32 = vector.load %arg8[%31, %c0_16] : memref<128x128xf32, #tpu.memory_space<vmem>>, vector<128x128xf32>
    tpu.vector_store %arg8[%31, %c0_16], %30 {strides = array<i32>} : memref<128x128xf32, #tpu.memory_space<vmem>>, vector<128x128xf32>,
    %c1_i32_17 = arith.constant 1 : i32
    %c2_i32 = arith.constant 2 : i32
    %33 = arith.cmpi eq, %arg0, %c2_i32 : i32
    %34 = arith.extui %33 : i1 to i32
    %c0_i32_18 = arith.constant 0 : i32
    %35 = arith.cmpi ne, %34, %c0_i32_18 : i32
    scf.if %35 {
      %c0_19 = arith.constant 0 : index
      %c0_20 = arith.constant 0 : index
      %36 = vector.load %arg8[%c0_19, %c0_20] : memref<128x128xf32, #tpu.memory_space<vmem>>, vector<128x128xf32>
      %c0_21 = arith.constant 0 : index
      %c0_22 = arith.constant 0 : index
      %37 = vector.load %arg6[%c0_21, %c0_22] : memref<128x128xf32, #tpu.memory_space<vmem>>, vector<128x128xf32>
      tpu.vector_store %arg6[%c0_21, %c0_22], %36 {strides = array<i32>} : memref<128x128xf32, #tpu.memory_space<vmem>>, vector<128x128xf32>,
    } else {
    }
    return
  }
  func.func @transform_1(%arg0: i32) -> (i32, i32) {
    %c0_i32 = arith.constant 0 : i32
    %c0_i32_0 = arith.constant 0 : i32
    %c0_i32_1 = arith.constant 0 : i32
    return %c0_i32, %c0_i32_0 : i32, i32
  }
  func.func @transform_2(%arg0: i32) -> (i32, i32) {
    %c0_i32 = arith.constant 0 : i32
    %c0_i32_0 = arith.constant 0 : i32
    %c0_i32_1 = arith.constant 0 : i32
    return %c0_i32, %c0_i32_0 : i32, i32
  }
  func.func @transform_3(%arg0: i32) -> (i32, i32, i32) {
    %c0_i32 = arith.constant 0 : i32
    %c0_i32_0 = arith.constant 0 : i32
    %c0_i32_1 = arith.constant 0 : i32
    return %arg0, %c0_i32, %c0_i32_0 : i32, i32, i32
  }
  func.func @transform_4(%arg0: i32) -> (i32, i32, i32) {
    %c0_i32 = arith.constant 0 : i32
    %c0_i32_0 = arith.constant 0 : i32
    %c0_i32_1 = arith.constant 0 : i32
    return %arg0, %c0_i32, %c0_i32_0 : i32, i32, i32
  }
  func.func @transform_5(%arg0: i32) -> (i32, i32) {
    %c0_i32 = arith.constant 0 : i32
    %c0_i32_0 = arith.constant 0 : i32
    %c0_i32_1 = arith.constant 0 : i32
    return %c0_i32, %c0_i32_0 : i32, i32
  }
}

</mosaic_0001>

<llo_original>
// kernel: tpu_custom_call.1
$region0: #{tpu_custom_call.1}
  #allocation0 [shape = 'u32[]', space=smem, size = 0x4, offset = 0x4, fixed_abs, tag = 'smem constant byte address 0x4 - core index']
  #allocation1 [shape = 'u32[144,128]{1,0:T(1,128)}', space=vmem, size = 0x12000, scoped, tag = 'internal scratch']
  #allocation2 [shape = 's8[128,128]{1,0:T(32,128)(4,1)}', space=vmem, size = 0x4000, scoped, tag = 'scratch operand']
  #allocation3 [shape = 'f32[128,128]{1,0:T(8,128)}', space=vmem, size = 0x10000, scoped, tag = 'scratch operand']
  #allocation9 [shape = 's32[]', space=sflag, size = 0x4, offset = 0, fixed_abs, tag = 'sflag constant byte address 0x0 - dummy sync flag']
  %s0 = inlined_call_operand.vmem [shape: s8[128,128], index: 0, kind: input, shape index: {}]
  %s1 = inlined_call_operand.vmem [shape: f32[128,1], index: 1, kind: input, shape index: {}]
  %s2 = inlined_call_operand.vmem [shape: bf16[128,128], index: 2, kind: input, shape index: {}]
  %s3 = inlined_call_operand.hbm [shape: bf16[3,128,128], index: 3, kind: input, shape index: {}]
  %s4 = inlined_call_operand.vmem [shape: f32[3,1,128], index: 4, kind: input, shape index: {}]
  %s5 = inlined_call_operand.hbm [shape: f32[128,128], index: 5, kind: output, shape index: {}]
  %s6 = sld [smem:[#allocation0]]
  $region96: #{tpu_custom_call.1} parent=0
    _
  %s8 = ssub.s32 1, %s6
  %s9 = scalar_select 0, %s8, %s6
  $region1: #{tpu_custom_call.1} parent=0
    #allocation4 [shape = 'u8[65536]{0}', space=vmem, size = 0x10000, scoped, tag = 'input window, operand 3']
    #allocation5 [shape = 's32[2]{0}', space=sflag, size = 0x8, scoped, tag = 'scoped memory for tpu_custom_call.1']
    #allocation6 [shape = 's32[2]{0}', space=sflag, size = 0x8, scoped, tag = 'scoped memory for tpu_custom_call.1']
    #allocation7 [shape = 'u8[65536]{0}', space=vmem, size = 0x10000, scoped, tag = 'output window, operand 0, single buffered']
    %10 = vsyncpa [#allocation5], 0
    %s11 = scalar_lea.sflag [#allocation5], 1
    %12 = vsyncpa %s11, 0
    %13 = vsyncpa [#allocation6], 0
    loop: start=0, step=1, limit=5
    $region2: #{tpu_custom_call.1} parent=1 // loop_pre_header
      _
    $region3: #{tpu_custom_call.1} parent=1 // loop_header
      %s15 = sphi 0, %s19
      %p16 = scmp.ge.s32.totalorder %s15, 5
      %s23 = sphi 0, %s23
      %s25 = sphi 0, %s23
      %s26 = sphi 0, %s25
      %s40 = sphi 0, %s26
      %s44 = sphi 0, %s44
      %s46 = sphi 0, %s44
      %s47 = sphi 0, %s46
      %s61 = sphi 0, %s47
      %s67 = sphi 0, %s69
      %s70 = sphi 0, %s67
      %s71 = sphi 0, %s70
      %s87 = sphi 0, %s71
      %s93 = sphi 0, %s95
      %s96 = sphi 0, %s93
      %s97 = sphi 0, %s96
      %s113 = sphi 0, %s97
      %s117 = sphi 0, %s117
      %s119 = sphi 0, %s117
      %s120 = sphi 0, %s119
      %s134 = sphi 0, %s120
    $region4: #{tpu_custom_call.1} parent=1 // loop_header_branch
      %18 = sbr.rel (%p16) target = $region8
    $region5: #{tpu_custom_call.1} parent=1 // loop_body
      %s20 = ssub.s32 %s15, 1
      %s21 = ssub.s32 %s15, 2
      %s22 = sadd.s32 %s15, 1
      %s24 = sadd.s32 %s23, 1
      %p27 = scmp.eq.s32.totalorder %s15, 2
      %p28 = scmp.ne.s32.totalorder %s23, %s25
      %p29 = scmp.eq.s32.totalorder %s15, 0
      %p30 = por %p28, %p29
      %p31 = scmp.ne.s32.totalorder %s23, %s25
      %p32 = scmp.eq.s32.totalorder %s20, 2
      %p33 = por %p31, %p32
      %p34 = scmp.ne.s32.totalorder %s25, %s26
      %p35 = scmp.eq.s32.totalorder %s20, 0
      %p36 = por %p34, %p35
      %p37 = scmp.ne.s32.totalorder %s25, %s26
      %p38 = scmp.eq.s32.totalorder %s21, 2
      %p39 = por %p37, %p38
      %p41 = scmp.ne.s32.totalorder %s26, %s40
      %p42 = scmp.eq.s32.totalorder %s21, 0
      %p43 = por %p41, %p42
      %s45 = sadd.s32 %s44, 1
      %p48 = scmp.eq.s32.totalorder %s15, 2
      %p49 = scmp.ne.s32.totalorder %s44, %s46
      %p50 = scmp.eq.s32.totalorder %s15, 0
      %p51 = por %p49, %p50
      %p52 = scmp.ne.s32.totalorder %s44, %s46
      %p53 = scmp.eq.s32.totalorder %s20, 2
      %p54 = por %p52, %p53
      %p55 = scmp.ne.s32.totalorder %s46, %s47
      %p56 = scmp.eq.s32.totalorder %s20, 0
      %p57 = por %p55, %p56
      %p58 = scmp.ne.s32.totalorder %s46, %s47
      %p59 = scmp.eq.s32.totalorder %s21, 2
      %p60 = por %p58, %p59
      %p62 = scmp.ne.s32.totalorder %s47, %s61
      %p63 = scmp.eq.s32.totalorder %s21, 0
      %p64 = por %p62, %p63
      %s65 = ssub.s32 %s15, %s22
      %p66 = scmp.eq.s32.totalorder %s65, 0
      %s68 = sadd.s32 %s67, 1
      %s69 = scalar_select %p66, %s67, %s68
      %p72 = pneg %p66
      %p73 = scmp.eq.s32.totalorder %s15, 2
      %p74 = por %p72, %p73
      %p75 = scmp.ne.s32.totalorder %s67, %s70
      %p76 = scmp.eq.s32.totalorder %s15, 0
      %p77 = por %p75, %p76
      %p78 = scmp.ne.s32.totalorder %s67, %s70
      %p79 = scmp.eq.s32.totalorder %s20, 2
      %p80 = por %p78, %p79
      %p81 = scmp.ne.s32.totalorder %s70, %s71
      %p82 = scmp.eq.s32.totalorder %s20, 0
      %p83 = por %p81, %p82
      %p84 = scmp.ne.s32.totalorder %s70, %s71
      %p85 = scmp.eq.s32.totalorder %s21, 2
      %p86 = por %p84, %p85
      %p88 = scmp.ne.s32.totalorder %s71, %s87
      %p89 = scmp.eq.s32.totalorder %s21, 0
      %p90 = por %p88, %p89
      %s91 = ssub.s32 %s15, %s22
      %p92 = scmp.eq.s32.totalorder %s91, 0
      %s94 = sadd.s32 %s93, 1
      %s95 = scalar_select %p92, %s93, %s94
      %p98 = pneg %p92
      %p99 = scmp.eq.s32.totalorder %s15, 2
      %p100 = por %p98, %p99
      %p101 = scmp.ne.s32.totalorder %s93, %s96
      %p102 = scmp.eq.s32.totalorder %s15, 0
      %p103 = por %p101, %p102
      %p104 = scmp.ne.s32.totalorder %s93, %s96
      %p105 = scmp.eq.s32.totalorder %s20, 2
      %p106 = por %p104, %p105
      %p107 = scmp.ne.s32.totalorder %s96, %s97
      %p108 = scmp.eq.s32.totalorder %s20, 0
      %p109 = por %p107, %p108
      %p110 = scmp.ne.s32.totalorder %s96, %s97
      %p111 = scmp.eq.s32.totalorder %s21, 2
      %p112 = por %p110, %p111
      %p114 = scmp.ne.s32.totalorder %s97, %s113
      %p115 = scmp.eq.s32.totalorder %s21, 0
      %p116 = por %p114, %p115
      %s118 = sadd.s32 %s117, 1
      %p121 = scmp.eq.s32.totalorder %s15, 2
      %p122 = scmp.ne.s32.totalorder %s117, %s119
      %p123 = scmp.eq.s32.totalorder %s15, 0
      %p124 = por %p122, %p123
      %p125 = scmp.ne.s32.totalorder %s117, %s119
      %p126 = scmp.eq.s32.totalorder %s20, 2
      %p127 = por %p125, %p126
      %p128 = scmp.ne.s32.totalorder %s119, %s120
      %p129 = scmp.eq.s32.totalorder %s20, 0
      %p130 = por %p128, %p129
      %p131 = scmp.ne.s32.totalorder %s119, %s120
      %p132 = scmp.eq.s32.totalorder %s21, 2
      %p133 = por %p131, %p132
      %p135 = scmp.ne.s32.totalorder %s120, %s134
      %p136 = scmp.eq.s32.totalorder %s21, 0
      %p137 = por %p135, %p136
      %p138 = scmp.le.s32.totalorder 1, %s15
      %p139 = scmp.lt.s32.totalorder %s15, 4
      %p140 = pnand %p138, %p139
      %p141 = pneg %p140
      // Predicated region
      $region9: #{tpu_custom_call.1} parent=5 // pred_check
        _
      $region10: #{tpu_custom_call.1} parent=5 // pred_check_branch
        %143 = sbr.rel (%p140) target = $region12
      $region11: #{tpu_custom_call.1} parent=5 // pred_region
        %s144 = ssub.s32 %s15, 1
        // Predicated region
        $region13: #{tpu_custom_call.1} parent=11 // pred_check
          %p145 = pneg %p36
        $region14: #{tpu_custom_call.1} parent=11 // pred_check_branch
          %147 = sbr.rel (%p145) target = $region16
        $region15: #{tpu_custom_call.1} parent=11 // pred_region
          _
        $region16: #{tpu_custom_call.1} parent=11 // pred_fallthru
          _
        // Predicated region
        $region17: #{tpu_custom_call.1} parent=11 // pred_check
          %p148 = pneg %p57
        $region18: #{tpu_custom_call.1} parent=11 // pred_check_branch
          %150 = sbr.rel (%p148) target = $region20
        $region19: #{tpu_custom_call.1} parent=11 // pred_region
          _
        $region20: #{tpu_custom_call.1} parent=11 // pred_fallthru
          _
      $region12: #{tpu_custom_call.1} parent=5 // pred_fallthru
        _
      %p151 = scmp.lt.s32.totalorder %s15, 3
      // Predicated region
      $region21: #{tpu_custom_call.1} parent=5 // pred_check
        %p152 = pneg %p151
      $region22: #{tpu_custom_call.1} parent=5 // pred_check_branch
        %154 = sbr.rel (%p152) target = $region24
      $region23: #{tpu_custom_call.1} parent=5 // pred_region
        // Predicated region
        $region25: #{tpu_custom_call.1} parent=23 // pred_check
          %p155 = pneg %p77
        $region26: #{tpu_custom_call.1} parent=23 // pred_check_branch
          %157 = sbr.rel (%p155) target = $region28
        $region27: #{tpu_custom_call.1} parent=23 // pred_region
          %s158 = sand.u32 %s67, 1
          %s159 = scalar_lea.sflag [#allocation5], %s158
          %s160 = sand.u32 %s67, 1
          %s161 = smul.addr %s160, 64
          %s162 = scalar_lea.vmem [#allocation4], %s161
          %s164 = ssub.s32 1024, 1024
          %165 = vsyncadd %s159, %s164
          %s166 = smul.addr %s15, 16
          %s167 = smul.addr %s166, 64
          %s168 = scalar_lea.hbm %s3, %s167
          %s169 = sshll.u32 %s162, 4
          %s170 = int_to_ptr.vmem [resolvable:$true] %s169
          %175 = dma.hbm_to_vmem [thread:$0]  %s168, 1024, %s170, %s159, 64, 64, 4
        $region28: #{tpu_custom_call.1} parent=23 // pred_fallthru
          _
        // Predicated region
        $region29: #{tpu_custom_call.1} parent=23 // pred_check
          %p176 = pneg %p103
        $region30: #{tpu_custom_call.1} parent=23 // pred_check_branch
          %178 = sbr.rel (%p176) target = $region32
        $region31: #{tpu_custom_call.1} parent=23 // pred_region
          %p179 = scmp.lt.s32.totalorder %s15, 2
          %s180 = scalar_select %p179, %s15, 2
          %s181 = scalar_lea.vmem %s4, %s180
        $region32: #{tpu_custom_call.1} parent=23 // pred_fallthru
          _
      $region24: #{tpu_custom_call.1} parent=5 // pred_fallthru
        _
      %p182 = scmp.le.s32.totalorder 1, %s15
      %p183 = scmp.lt.s32.totalorder %s15, 4
      %p184 = pnand %p182, %p183
      %p185 = pneg %p184
      // Predicated region
      $region33: #{tpu_custom_call.1} parent=5 // pred_check
        _
      $region34: #{tpu_custom_call.1} parent=5 // pred_check_branch
        %187 = sbr.rel (%p184) target = $region36
      $region35: #{tpu_custom_call.1} parent=5 // pred_region
        %s188 = ssub.s32 %s15, 1
        %s189 = sand.u32 %s70, 1
        %s190 = scalar_lea.sflag [#allocation5], %s189
        %s191 = sand.u32 %s70, 1
        %s192 = smul.addr %s191, 64
        %s193 = scalar_lea.vmem [#allocation4], %s192
        // Predicated region
        $region37: #{tpu_custom_call.1} parent=35 // pred_check
          %p194 = pneg %p83
        $region38: #{tpu_custom_call.1} parent=35 // pred_check_branch
          %196 = sbr.rel (%p194) target = $region40
        $region39: #{tpu_custom_call.1} parent=35 // pred_region
          %197 = dma.done %s190, 1024
        $region40: #{tpu_custom_call.1} parent=35 // pred_fallthru
          _
        %p198 = pneg %p36
        %p199 = pneg %p33
        %p200 = pneg %p57
        %p201 = pneg %p54
        %s202 = sand.u32 %s70, 1
        %s203 = scalar_lea.sflag [#allocation5], %s202
        %s204 = sand.u32 %s70, 1
        %s205 = smul.addr %s204, 64
        %s206 = scalar_lea.vmem [#allocation4], %s205
        %p207 = pneg %p83
        %p208 = pneg %p80
        %p209 = scmp.lt.s32.totalorder %s20, 2
        %s210 = scalar_select %p209, %s20, 2
        %s211 = scalar_lea.vmem %s4, %s210
        %p212 = pneg %p109
        %p213 = pneg %p106
        %p214 = pneg %p130
        %p215 = pneg %p127
        %p216 = scmp.lt.s32.totalorder %s20, 2
        %s217 = scalar_select %p216, %s20, 2
        %s218 = scalar_lea.vmem %s4, %s217
        %p220 = scmp.eq.s32.totalorder %s20, 0
        // Predicated region
        $region41: #{tpu_custom_call.1} parent=35 // pred_check
          %p221 = pneg %p220
        $region42: #{tpu_custom_call.1} parent=35 // pred_check_branch
          %223 = sbr.rel (%p221) target = $region44
        $region43: #{tpu_custom_call.1} parent=35 // pred_region
          $region45: #{tpu_custom_call.1} parent=43
            #allocation8 [shape = 's32[1]{0}', space=sflag, size = 0x4, scoped, tag = 'scoped memory for tpu_custom_call.1']
            %p225 = scmp.lt.u32.totalorder 32, 8
            %p226 = pneg %p225
            // Predicated region
            $region46: #{tpu_custom_call.1} parent=45 // pred_check
              _
            $region47: #{tpu_custom_call.1} parent=45 // pred_check_branch
              %228 = sbr.rel (%p225) target = $region49
            $region48: #{tpu_custom_call.1} parent=45 // pred_region
              %s243 = sand.u32 32, 7
              %p244 = scmp.eq.s32.totalorder %s243, 0
              // Predicated region
              $region61: #{tpu_custom_call.1} parent=48 // pred_check
                %p245 = pneg %p244
              $region62: #{tpu_custom_call.1} parent=48 // pred_check_branch
                %247 = sbr.rel (%p245) target = $region64
              $region63: #{tpu_custom_call.1} parent=48 // pred_region
                loop: start=0, step=1, limit=1
                $region65: #{tpu_custom_call.1} parent=63 // loop_pre_header
                  _
                $region66: #{tpu_custom_call.1} parent=63 // loop_header
                  %s249 = sphi 0, %s253
                  %p250 = scmp.ge.s32.totalorder %s249, 1
                  %s254 = sphi %s0, %s0
                  %s255 = sphi [#allocation2], [#allocation2]
                $region67: #{tpu_custom_call.1} parent=63 // loop_header_branch
                  %252 = sbr.rel (%p250) target = $region71
                $region68: #{tpu_custom_call.1} parent=63 // loop_body
                  %v256 = vld [vmem:[%s254] sm:$0xff]
                  %257 = vst [vmem:[%s255] sm:$0xff] %v256
                  %v258 = vld [vmem:[%s254 + $0x8] sm:$0xff]
                  %259 = vst [vmem:[%s255 + $0x8] sm:$0xff] %v258
                  %v260 = vld [vmem:[%s254 + $0x10] sm:$0xff]
                  %261 = vst [vmem:[%s255 + $0x10] sm:$0xff] %v260
                  %v262 = vld [vmem:[%s254 + $0x18] sm:$0xff]
                  %263 = vst [vmem:[%s255 + $0x18] sm:$0xff] %v262
                $region69: #{tpu_custom_call.1} parent=63 // loop_footer
                  %s253 = sadd.s32 1, %s249
                $region70: #{tpu_custom_call.1} parent=63 // loop_footer_branch
                  %248 = sbr.rel target = $region66
                $region71: #{tpu_custom_call.1} parent=63 // loop_exit
                  _
              $region64: #{tpu_custom_call.1} parent=48 // pred_fallthru
                _
              %p264 = pneg %p244
              // Predicated region
              $region72: #{tpu_custom_call.1} parent=48 // pred_check
                _
              $region73: #{tpu_custom_call.1} parent=48 // pred_check_branch
                %266 = sbr.rel (%p244) target = $region75
              $region74: #{tpu_custom_call.1} parent=48 // pred_region
                %s267 = sand.u32 32, 7
              $region75: #{tpu_custom_call.1} parent=48 // pred_fallthru
                _
            $region49: #{tpu_custom_call.1} parent=45 // pred_fallthru
              _
            // Predicated region
            $region50: #{tpu_custom_call.1} parent=45 // pred_check
              %p229 = pneg %p225
            $region51: #{tpu_custom_call.1} parent=45 // pred_check_branch
              %231 = sbr.rel (%p229) target = $region53
            $region52: #{tpu_custom_call.1} parent=45 // pred_region
              %s232 = sshllo.u32 0, 32
              loop: start=0, step=1, limit=1
              $region54: #{tpu_custom_call.1} parent=52 // loop_pre_header
                _
              $region55: #{tpu_custom_call.1} parent=52 // loop_header
                %s234 = sphi 0, %s238
                %p235 = scmp.ge.s32.totalorder %s234, 1
                %s239 = sphi %s0, %s0
                %s240 = sphi [#allocation2], [#allocation2]
              $region56: #{tpu_custom_call.1} parent=52 // loop_header_branch
                %237 = sbr.rel (%p235) target = $region60
              $region57: #{tpu_custom_call.1} parent=52 // loop_body
                %v241 = vld [vmem:[%s239] sm:%s232]
                %242 = vst [vmem:[%s240] sm:%s232] %v241
              $region58: #{tpu_custom_call.1} parent=52 // loop_footer
                %s238 = sadd.s32 1, %s234
              $region59: #{tpu_custom_call.1} parent=52 // loop_footer_branch
                %233 = sbr.rel target = $region55
              $region60: #{tpu_custom_call.1} parent=52 // loop_exit
                _
            $region53: #{tpu_custom_call.1} parent=45 // pred_fallthru
              _
            // Predicated region
            $region76: #{tpu_custom_call.1} parent=45 // pred_check
              _
            $region77: #{tpu_custom_call.1} parent=45 // pred_check_branch
              %270 = sbr.rel (0) target = $region79
            $region78: #{tpu_custom_call.1} parent=45 // pred_region
              %271 = vsyncadd [#allocation8], 512
            $region79: #{tpu_custom_call.1} parent=45 // pred_fallthru
              _
            %s272 = smul.u32 2, 16
            %s273 = smul.u32 %s272, 1
            %s274 = sshll.u32 %s273, 4
            %275 = dma.done [#allocation8], %s274
          %v276 = vld [vmem:[%s2] sm:$0xf]
          %v277 = vld [vmem:[%s2 + $0x4] sm:$0xf]
          %v278 = vld [vmem:[%s2 + $0x8] sm:$0xf]
          %v279 = vld [vmem:[%s2 + $0xc] sm:$0xf]
          %v280 = vld [vmem:[%s2 + $0x10] sm:$0xf]
          %v281 = vld [vmem:[%s2 + $0x14] sm:$0xf]
          %v282 = vld [vmem:[%s2 + $0x18] sm:$0xf]
          %v283 = vld [vmem:[%s2 + $0x1c] sm:$0xf]
          %v284 = vld [vmem:[%s2 + $0x20] sm:$0xf]
          %v285 = vld [vmem:[%s2 + $0x24] sm:$0xf]
          %v286 = vld [vmem:[%s2 + $0x28] sm:$0xf]
          %v287 = vld [vmem:[%s2 + $0x2c] sm:$0xf]
          %v288 = vld [vmem:[%s2 + $0x30] sm:$0xf]
          %v289 = vld [vmem:[%s2 + $0x34] sm:$0xf]
          %v290 = vld [vmem:[%s2 + $0x38] sm:$0xf]
          %v291 = vld [vmem:[%s2 + $0x3c] sm:$0xf]
          %v292 = vunpack.c.l.bf16 %v276
          %v293 = vunpack.c.l.bf16 %v277
          %v294 = vunpack.c.l.bf16 %v278
          %v295 = vunpack.c.l.bf16 %v279
          %v296 = vunpack.c.l.bf16 %v280
          %v297 = vunpack.c.l.bf16 %v281
          %v298 = vunpack.c.l.bf16 %v282
          %v299 = vunpack.c.l.bf16 %v283
          %v300 = vunpack.c.l.bf16 %v284
          %v301 = vunpack.c.l.bf16 %v285
          %v302 = vunpack.c.l.bf16 %v286
          %v303 = vunpack.c.l.bf16 %v287
          %v304 = vunpack.c.l.bf16 %v288
          %v305 = vunpack.c.l.bf16 %v289
          %v306 = vunpack.c.l.bf16 %v290
          %v307 = vunpack.c.l.bf16 %v291
          %308 = vst [vmem:[#allocation3] sm:$0xff] %v292
          %309 = vst [vmem:[#allocation3 + $0x8] sm:$0xff] %v293
          %310 = vst [vmem:[#allocation3 + $0x10] sm:$0xff] %v294
          %311 = vst [vmem:[#allocation3 + $0x18] sm:$0xff] %v295
          %312 = vst [vmem:[#allocation3 + $0x20] sm:$0xff] %v296
          %313 = vst [vmem:[#allocation3 + $0x28] sm:$0xff] %v297
          %314 = vst [vmem:[#allocation3 + $0x30] sm:$0xff] %v298
          %315 = vst [vmem:[#allocation3 + $0x38] sm:$0xff] %v299
          %316 = vst [vmem:[#allocation3 + $0x40] sm:$0xff] %v300
          %317 = vst [vmem:[#allocation3 + $0x48] sm:$0xff] %v301
          %318 = vst [vmem:[#allocation3 + $0x50] sm:$0xff] %v302
          %319 = vst [vmem:[#allocation3 + $0x58] sm:$0xff] %v303
          %320 = vst [vmem:[#allocation3 + $0x60] sm:$0xff] %v304
          %321 = vst [vmem:[#allocation3 + $0x68] sm:$0xff] %v305
          %322 = vst [vmem:[#allocation3 + $0x70] sm:$0xff] %v306
          %323 = vst [vmem:[#allocation3 + $0x78] sm:$0xff] %v307
        $region44: #{tpu_custom_call.1} parent=35 // pred_fallthru
          _
        %v324 = vld [vmem:[#allocation3] sm:$0xff]
        %v325 = vld [vmem:[#allocation3 + $0x8] sm:$0xff]
        %v326 = vld [vmem:[#allocation3 + $0x10] sm:$0xff]
        %v327 = vld [vmem:[#allocation3 + $0x18] sm:$0xff]
        %v328 = vld [vmem:[#allocation3 + $0x20] sm:$0xff]
        %v329 = vld [vmem:[#allocation3 + $0x28] sm:$0xff]
        %v330 = vld [vmem:[#allocation3 + $0x30] sm:$0xff]
        %v331 = vld [vmem:[#allocation3 + $0x38] sm:$0xff]
        %v332 = vld [vmem:[#allocation3 + $0x40] sm:$0xff]
        %v333 = vld [vmem:[#allocation3 + $0x48] sm:$0xff]
        %v334 = vld [vmem:[#allocation3 + $0x50] sm:$0xff]
        %v335 = vld [vmem:[#allocation3 + $0x58] sm:$0xff]
        %v336 = vld [vmem:[#allocation3 + $0x60] sm:$0xff]
        %v337 = vld [vmem:[#allocation3 + $0x68] sm:$0xff]
        %v338 = vld [vmem:[#allocation3 + $0x70] sm:$0xff]
        %v339 = vld [vmem:[#allocation3 + $0x78] sm:$0xff]
        %v340 = vpack.c.bf16 %v325, %v324
        %v341 = vpack.c.bf16 %v327, %v326
        %v342 = vpack.c.bf16 %v329, %v328
        %v343 = vpack.c.bf16 %v331, %v330
        %v344 = vpack.c.bf16 %v333, %v332
        %v345 = vpack.c.bf16 %v335, %v334
        %v346 = vpack.c.bf16 %v337, %v336
        %v347 = vpack.c.bf16 %v339, %v338
        %v348 = vld [vmem:[%s193] sm:$0xf]
        %v349 = vld [vmem:[%s193 + $0x4] sm:$0xf]
        %v350 = vld [vmem:[%s193 + $0x8] sm:$0xf]
        %v351 = vld [vmem:[%s193 + $0xc] sm:$0xf]
        %v352 = vld [vmem:[%s193 + $0x10] sm:$0xf]
        %v353 = vld [vmem:[%s193 + $0x14] sm:$0xf]
        %v354 = vld [vmem:[%s193 + $0x18] sm:$0xf]
        %v355 = vld [vmem:[%s193 + $0x1c] sm:$0xf]
        %v356 = vld [vmem:[%s193 + $0x20] sm:$0xf]
        %v357 = vld [vmem:[%s193 + $0x24] sm:$0xf]
        %v358 = vld [vmem:[%s193 + $0x28] sm:$0xf]
        %v359 = vld [vmem:[%s193 + $0x2c] sm:$0xf]
        %v360 = vld [vmem:[%s193 + $0x30] sm:$0xf]
        %v361 = vld [vmem:[%s193 + $0x34] sm:$0xf]
        %v362 = vld [vmem:[%s193 + $0x38] sm:$0xf]
        %v363 = vld [vmem:[%s193 + $0x3c] sm:$0xf]
        %v380 = vunpack.c.l.b16 %v348
        %v381 = vunpack.c.l.b16 %v349
        %v382 = vunpack.c.l.b16 %v350
        %v383 = vunpack.c.l.b16 %v351
        %v384 = vunpack.c.l.b16 %v352
        %v385 = vunpack.c.l.b16 %v353
        %v386 = vunpack.c.l.b16 %v354
        %v387 = vunpack.c.l.b16 %v355
        %v388 = vunpack.c.l.b16 %v356
        %v389 = vunpack.c.l.b16 %v357
        %v390 = vunpack.c.l.b16 %v358
        %v391 = vunpack.c.l.b16 %v359
        %v392 = vunpack.c.l.b16 %v360
        %v393 = vunpack.c.l.b16 %v361
        %v394 = vunpack.c.l.b16 %v362
        %v395 = vunpack.c.l.b16 %v363
        %v396 = vpack.c.b16 %v381, %v380
        %v397 = vpack.c.b16 %v383, %v382
        %v398 = vpack.c.b16 %v385, %v384
        %v399 = vpack.c.b16 %v387, %v386
        %v400 = vpack.c.b16 %v389, %v388
        %v401 = vpack.c.b16 %v391, %v390
        %v402 = vpack.c.b16 %v393, %v392
        %v403 = vpack.c.b16 %v395, %v394
        %412 = vmatprep.subr.bf16.mxu0 0
        %413 = vmatpush1.bf16.msra.mxu0 %v396
        %414 = vmatprep.subr.bf16.mxu0 0
        %415 = vmatpush1.bf16.msra.mxu0 %v397
        %416 = vmatprep.subr.bf16.mxu0 0
        %417 = vmatpush1.bf16.msra.mxu0 %v398
        %418 = vmatprep.subr.bf16.mxu0 0
        %419 = vmatpush1.bf16.msra.mxu0 %v399
        %420 = vmatprep.subr.bf16.mxu0 0
        %421 = vmatpush1.bf16.msra.mxu0 %v400
        %422 = vmatprep.subr.bf16.mxu0 0
        %423 = vmatpush1.bf16.msra.mxu0 %v401
        %424 = vmatprep.subr.bf16.mxu0 0
        %425 = vmatpush1.bf16.msra.mxu0 %v402
        %426 = vmatprep.subr.bf16.mxu0 0
        %427 = vmatpush1.bf16.msra.mxu0 %v403
        %428 = vmatprep.subr.bf16.mxu0 0
        %429 = vmatpush1.bf16.msra.mxu0 0
        %430 = vmatprep.subr.bf16.mxu0 0
        %431 = vmatpush1.bf16.msra.mxu0 0
        %432 = vmatprep.subr.bf16.mxu0 0
        %433 = vmatpush1.bf16.msra.mxu0 0
        %434 = vmatprep.subr.bf16.mxu0 0
        %435 = vmatpush1.bf16.msra.mxu0 0
        %436 = vmatprep.subr.bf16.mxu0 0
        %437 = vmatpush1.bf16.msra.mxu0 0
        %438 = vmatprep.subr.bf16.mxu0 0
        %439 = vmatpush1.bf16.msra.mxu0 0
        %440 = vmatprep.subr.bf16.mxu0 0
        %441 = vmatpush1.bf16.msra.mxu0 0
        %442 = vmatprep.subr.bf16.mxu0 0
        %443 = vmatpush1.bf16.msra.mxu0 0
        %444 = vmatprep.mubr.bf16.mxu0 0
        %445 = vmatmul.mubr.bf16.gmra.mrb[0].mxu0 %v340
        %v446 = vpop.f32.mrb[0].mxu0
        %v447 = vadd.f32 0.0, %v446
        %v448 = vpop.f32.mrb[0].mxu0
        %v449 = vpop.f32.mrb[0].mxu0
        %v450 = vadd.f32 0.0, %v449
        %v451 = vpop.f32.mrb[0].mxu0
        %452 = vmatprep.mubr.bf16.mxu0 0
        %453 = vmatmul.mubr.bf16.gmra.mrb[0].mxu0 %v341
        %v454 = vpop.f32.mrb[0].mxu0
        %v455 = vadd.f32 0.0, %v454
        %v456 = vpop.f32.mrb[0].mxu0
        %v457 = vpop.f32.mrb[0].mxu0
        %v458 = vadd.f32 0.0, %v457
        %v459 = vpop.f32.mrb[0].mxu0
        %460 = vmatprep.mubr.bf16.mxu0 0
        %461 = vmatmul.mubr.bf16.gmra.mrb[0].mxu0 %v342
        %v462 = vpop.f32.mrb[0].mxu0
        %v463 = vadd.f32 0.0, %v462
        %v464 = vpop.f32.mrb[0].mxu0
        %v465 = vpop.f32.mrb[0].mxu0
        %v466 = vadd.f32 0.0, %v465
        %v467 = vpop.f32.mrb[0].mxu0
        %468 = vmatprep.mubr.bf16.mxu0 0
        %469 = vmatmul.mubr.bf16.gmra.mrb[0].mxu0 %v343
        %v470 = vpop.f32.mrb[0].mxu0
        %v471 = vadd.f32 0.0, %v470
        %v472 = vpop.f32.mrb[0].mxu0
        %v473 = vpop.f32.mrb[0].mxu0
        %v474 = vadd.f32 0.0, %v473
        %v475 = vpop.f32.mrb[0].mxu0
        %476 = vmatprep.mubr.bf16.mxu0 0
        %477 = vmatmul.mubr.bf16.gmra.mrb[0].mxu0 %v344
        %v478 = vpop.f32.mrb[0].mxu0
        %v479 = vadd.f32 0.0, %v478
        %v480 = vpop.f32.mrb[0].mxu0
        %v481 = vpop.f32.mrb[0].mxu0
        %v482 = vadd.f32 0.0, %v481
        %v483 = vpop.f32.mrb[0].mxu0
        %484 = vmatprep.mubr.bf16.mxu0 0
        %485 = vmatmul.mubr.bf16.gmra.mrb[0].mxu0 %v345
        %v486 = vpop.f32.mrb[0].mxu0
        %v487 = vadd.f32 0.0, %v486
        %v488 = vpop.f32.mrb[0].mxu0
        %v489 = vpop.f32.mrb[0].mxu0
        %v490 = vadd.f32 0.0, %v489
        %v491 = vpop.f32.mrb[0].mxu0
        %492 = vmatprep.mubr.bf16.mxu0 0
        %493 = vmatmul.mubr.bf16.gmra.mrb[0].mxu0 %v346
        %v494 = vpop.f32.mrb[0].mxu0
        %v495 = vadd.f32 0.0, %v494
        %v496 = vpop.f32.mrb[0].mxu0
        %v497 = vpop.f32.mrb[0].mxu0
        %v498 = vadd.f32 0.0, %v497
        %v499 = vpop.f32.mrb[0].mxu0
        %500 = vmatprep.mubr.bf16.mxu0 0
        %501 = vmatmul.mubr.bf16.gmra.mrb[0].mxu0 %v347
        %v502 = vpop.f32.mrb[0].mxu0
        %v503 = vadd.f32 0.0, %v502
        %v504 = vpop.f32.mrb[0].mxu0
        %v505 = vpop.f32.mrb[0].mxu0
        %v506 = vadd.f32 0.0, %v505
        %v507 = vpop.f32.mrb[0].mxu0
        %508 = vdwg.mxu0
        %v509 = vld [vmem:[%s1] sm:$0xff]
        %v510 = vld [vmem:[%s1 + $0x8] sm:$0xff]
        %v511 = vld [vmem:[%s1 + $0x10] sm:$0xff]
        %v512 = vld [vmem:[%s1 + $0x18] sm:$0xff]
        %v513 = vld [vmem:[%s1 + $0x20] sm:$0xff]
        %v514 = vld [vmem:[%s1 + $0x28] sm:$0xff]
        %v515 = vld [vmem:[%s1 + $0x30] sm:$0xff]
        %v516 = vld [vmem:[%s1 + $0x38] sm:$0xff]
        %v517 = vld [vmem:[%s1 + $0x40] sm:$0xff]
        %v518 = vld [vmem:[%s1 + $0x48] sm:$0xff]
        %v519 = vld [vmem:[%s1 + $0x50] sm:$0xff]
        %v520 = vld [vmem:[%s1 + $0x58] sm:$0xff]
        %v521 = vld [vmem:[%s1 + $0x60] sm:$0xff]
        %v522 = vld [vmem:[%s1 + $0x68] sm:$0xff]
        %v523 = vld [vmem:[%s1 + $0x70] sm:$0xff]
        %v524 = vld [vmem:[%s1 + $0x78] sm:$0xff]
        %526 = vset.pattern.permute.xlu0 0
        %527 = vperm.xlu0 %526, %v509
        %v528 = vpop.permute.xlu0 %527
        %531 = vset.pattern.permute.xlu0 0
        %532 = vperm.xlu0 %531, %v510
        %v533 = vpop.permute.xlu0 %532
        %536 = vset.pattern.permute.xlu0 0
        %537 = vperm.xlu0 %536, %v511
        %v538 = vpop.permute.xlu0 %537
        %541 = vset.pattern.permute.xlu0 0
        %542 = vperm.xlu0 %541, %v512
        %v543 = vpop.permute.xlu0 %542
        %546 = vset.pattern.permute.xlu0 0
        %547 = vperm.xlu0 %546, %v513
        %v548 = vpop.permute.xlu0 %547
        %551 = vset.pattern.permute.xlu0 0
        %552 = vperm.xlu0 %551, %v514
        %v553 = vpop.permute.xlu0 %552
        %556 = vset.pattern.permute.xlu0 0
        %557 = vperm.xlu0 %556, %v515
        %v558 = vpop.permute.xlu0 %557
        %561 = vset.pattern.permute.xlu0 0
        %562 = vperm.xlu0 %561, %v516
        %v563 = vpop.permute.xlu0 %562
        %566 = vset.pattern.permute.xlu0 0
        %567 = vperm.xlu0 %566, %v517
        %v568 = vpop.permute.xlu0 %567
        %571 = vset.pattern.permute.xlu0 0
        %572 = vperm.xlu0 %571, %v518
        %v573 = vpop.permute.xlu0 %572
        %576 = vset.pattern.permute.xlu0 0
        %577 = vperm.xlu0 %576, %v519
        %v578 = vpop.permute.xlu0 %577
        %581 = vset.pattern.permute.xlu0 0
        %582 = vperm.xlu0 %581, %v520
        %v583 = vpop.permute.xlu0 %582
        %586 = vset.pattern.permute.xlu0 0
        %587 = vperm.xlu0 %586, %v521
        %v588 = vpop.permute.xlu0 %587
        %591 = vset.pattern.permute.xlu0 0
        %592 = vperm.xlu0 %591, %v522
        %v593 = vpop.permute.xlu0 %592
        %596 = vset.pattern.permute.xlu0 0
        %597 = vperm.xlu0 %596, %v523
        %v598 = vpop.permute.xlu0 %597
        %601 = vset.pattern.permute.xlu0 0
        %602 = vperm.xlu0 %601, %v524
        %v603 = vpop.permute.xlu0 %602
        %v605 = vmul.f32 %v528, %v447
        %v606 = vmul.f32 %v533, %v450
        %v607 = vmul.f32 %v538, %v455
        %v608 = vmul.f32 %v543, %v458
        %v609 = vmul.f32 %v548, %v463
        %v610 = vmul.f32 %v553, %v466
        %v611 = vmul.f32 %v558, %v471
        %v612 = vmul.f32 %v563, %v474
        %v613 = vmul.f32 %v568, %v479
        %v614 = vmul.f32 %v573, %v482
        %v615 = vmul.f32 %v578, %v487
        %v616 = vmul.f32 %v583, %v490
        %v617 = vmul.f32 %v588, %v495
        %v618 = vmul.f32 %v593, %v498
        %v619 = vmul.f32 %v598, %v503
        %v620 = vmul.f32 %v603, %v506
        %v621 = vpack.c.bf16 %v606, %v605
        %v622 = vpack.c.bf16 %v608, %v607
        %v623 = vpack.c.bf16 %v610, %v609
        %v624 = vpack.c.bf16 %v612, %v611
        %v625 = vpack.c.bf16 %v614, %v613
        %v626 = vpack.c.bf16 %v616, %v615
        %v627 = vpack.c.bf16 %v618, %v617
        %v628 = vpack.c.bf16 %v620, %v619
        %v629 = vld [vmem:[%s218] sm:$0x1]
        %v630 = vld [vmem:[#allocation2] sm:$0xff]
        %v631 = vld [vmem:[#allocation2 + $0x8] sm:$0xff]
        %v632 = vld [vmem:[#allocation2 + $0x10] sm:$0xff]
        %v633 = vld [vmem:[#allocation2 + $0x18] sm:$0xff]
        %v634 = vunpack.c.l.s8.bf16 %v630
        %v635 = vunpack.c.h.s8.bf16 %v630
        %v636 = vunpack.c.l.s8.bf16 %v631
        %v637 = vunpack.c.h.s8.bf16 %v631
        %v638 = vunpack.c.l.s8.bf16 %v632
        %v639 = vunpack.c.h.s8.bf16 %v632
        %v640 = vunpack.c.l.s8.bf16 %v633
        %v641 = vunpack.c.h.s8.bf16 %v633
        %642 = vmatprep.subr.bf16.mxu0 0
        %643 = vmatpush1.bf16.msra.mxu0 %v621
        %644 = vmatprep.subr.bf16.mxu0 0
        %645 = vmatpush1.bf16.msra.mxu0 %v622
        %646 = vmatprep.subr.bf16.mxu0 0
        %647 = vmatpush1.bf16.msra.mxu0 %v623
        %648 = vmatprep.subr.bf16.mxu0 0
        %649 = vmatpush1.bf16.msra.mxu0 %v624
        %650 = vmatprep.subr.bf16.mxu0 0
        %651 = vmatpush1.bf16.msra.mxu0 %v625
        %652 = vmatprep.subr.bf16.mxu0 0
        %653 = vmatpush1.bf16.msra.mxu0 %v626
        %654 = vmatprep.subr.bf16.mxu0 0
        %655 = vmatpush1.bf16.msra.mxu0 %v627
        %656 = vmatprep.subr.bf16.mxu0 0
        %657 = vmatpush1.bf16.msra.mxu0 %v628
        %658 = vmatprep.subr.bf16.mxu0 0
        %659 = vmatpush1.bf16.msra.mxu0 0
        %660 = vmatprep.subr.bf16.mxu0 0
        %661 = vmatpush1.bf16.msra.mxu0 0
        %662 = vmatprep.subr.bf16.mxu0 0
        %663 = vmatpush1.bf16.msra.mxu0 0
        %664 = vmatprep.subr.bf16.mxu0 0
        %665 = vmatpush1.bf16.msra.mxu0 0
        %666 = vmatprep.subr.bf16.mxu0 0
        %667 = vmatpush1.bf16.msra.mxu0 0
        %668 = vmatprep.subr.bf16.mxu0 0
        %669 = vmatpush1.bf16.msra.mxu0 0
        %670 = vmatprep.subr.bf16.mxu0 0
        %671 = vmatpush1.bf16.msra.mxu0 0
        %672 = vmatprep.subr.bf16.mxu0 0
        %673 = vmatpush1.bf16.msra.mxu0 0
        %674 = vmatprep.mubr.bf16.mxu0 0
        %675 = vmatmul.mubr.bf16.gmra.mrb[0].mxu0 %v634
        %v676 = vpop.f32.mrb[0].mxu0
        %v677 = vadd.f32 0.0, %v676
        %v678 = vpop.f32.mrb[0].mxu0
        %v679 = vpop.f32.mrb[0].mxu0
        %v680 = vadd.f32 0.0, %v679
        %v681 = vpop.f32.mrb[0].mxu0
        %682 = vmatprep.mubr.bf16.mxu0 0
        %683 = vmatmul.mubr.bf16.gmra.mrb[0].mxu0 %v635
        %v684 = vpop.f32.mrb[0].mxu0
        %v685 = vadd.f32 0.0, %v684
        %v686 = vpop.f32.mrb[0].mxu0
        %v687 = vpop.f32.mrb[0].mxu0
        %v688 = vadd.f32 0.0, %v687
        %v689 = vpop.f32.mrb[0].mxu0
        %690 = vmatprep.mubr.bf16.mxu0 0
        %691 = vmatmul.mubr.bf16.gmra.mrb[0].mxu0 %v636
        %v692 = vpop.f32.mrb[0].mxu0
        %v693 = vadd.f32 0.0, %v692
        %v694 = vpop.f32.mrb[0].mxu0
        %v695 = vpop.f32.mrb[0].mxu0
        %v696 = vadd.f32 0.0, %v695
        %v697 = vpop.f32.mrb[0].mxu0
        %698 = vmatprep.mubr.bf16.mxu0 0
        %699 = vmatmul.mubr.bf16.gmra.mrb[0].mxu0 %v637
        %v700 = vpop.f32.mrb[0].mxu0
        %v701 = vadd.f32 0.0, %v700
        %v702 = vpop.f32.mrb[0].mxu0
        %v703 = vpop.f32.mrb[0].mxu0
        %v704 = vadd.f32 0.0, %v703
        %v705 = vpop.f32.mrb[0].mxu0
        %706 = vmatprep.mubr.bf16.mxu0 0
        %707 = vmatmul.mubr.bf16.gmra.mrb[0].mxu0 %v638
        %v708 = vpop.f32.mrb[0].mxu0
        %v709 = vadd.f32 0.0, %v708
        %v710 = vpop.f32.mrb[0].mxu0
        %v711 = vpop.f32.mrb[0].mxu0
        %v712 = vadd.f32 0.0, %v711
        %v713 = vpop.f32.mrb[0].mxu0
        %714 = vmatprep.mubr.bf16.mxu0 0
        %715 = vmatmul.mubr.bf16.gmra.mrb[0].mxu0 %v639
        %v716 = vpop.f32.mrb[0].mxu0
        %v717 = vadd.f32 0.0, %v716
        %v718 = vpop.f32.mrb[0].mxu0
        %v719 = vpop.f32.mrb[0].mxu0
        %v720 = vadd.f32 0.0, %v719
        %v721 = vpop.f32.mrb[0].mxu0
        %722 = vmatprep.mubr.bf16.mxu0 0
        %723 = vmatmul.mubr.bf16.gmra.mrb[0].mxu0 %v640
        %v724 = vpop.f32.mrb[0].mxu0
        %v725 = vadd.f32 0.0, %v724
        %v726 = vpop.f32.mrb[0].mxu0
        %v727 = vpop.f32.mrb[0].mxu0
        %v728 = vadd.f32 0.0, %v727
        %v729 = vpop.f32.mrb[0].mxu0
        %730 = vmatprep.mubr.bf16.mxu0 0
        %731 = vmatmul.mubr.bf16.gmra.mrb[0].mxu0 %v641
        %v732 = vpop.f32.mrb[0].mxu0
        %v733 = vadd.f32 0.0, %v732
        %v734 = vpop.f32.mrb[0].mxu0
        %v735 = vpop.f32.mrb[0].mxu0
        %v736 = vadd.f32 0.0, %v735
        %v737 = vpop.f32.mrb[0].mxu0
        %738 = vdwg.mxu0
        %v739 = vld [vmem:[%s1] sm:$0xff]
        %v740 = vld [vmem:[%s1 + $0x8] sm:$0xff]
        %v741 = vld [vmem:[%s1 + $0x10] sm:$0xff]
        %v742 = vld [vmem:[%s1 + $0x18] sm:$0xff]
        %v743 = vld [vmem:[%s1 + $0x20] sm:$0xff]
        %v744 = vld [vmem:[%s1 + $0x28] sm:$0xff]
        %v745 = vld [vmem:[%s1 + $0x30] sm:$0xff]
        %v746 = vld [vmem:[%s1 + $0x38] sm:$0xff]
        %v747 = vld [vmem:[%s1 + $0x40] sm:$0xff]
        %v748 = vld [vmem:[%s1 + $0x48] sm:$0xff]
        %v749 = vld [vmem:[%s1 + $0x50] sm:$0xff]
        %v750 = vld [vmem:[%s1 + $0x58] sm:$0xff]
        %v751 = vld [vmem:[%s1 + $0x60] sm:$0xff]
        %v752 = vld [vmem:[%s1 + $0x68] sm:$0xff]
        %v753 = vld [vmem:[%s1 + $0x70] sm:$0xff]
        %v754 = vld [vmem:[%s1 + $0x78] sm:$0xff]
        %756 = vset.pattern.permute.xlu0 0
        %757 = vperm.xlu0 %756, %v739
        %v758 = vpop.permute.xlu0 %757
        %761 = vset.pattern.permute.xlu0 0
        %762 = vperm.xlu0 %761, %v740
        %v763 = vpop.permute.xlu0 %762
        %766 = vset.pattern.permute.xlu0 0
        %767 = vperm.xlu0 %766, %v741
        %v768 = vpop.permute.xlu0 %767
        %771 = vset.pattern.permute.xlu0 0
        %772 = vperm.xlu0 %771, %v742
        %v773 = vpop.permute.xlu0 %772
        %776 = vset.pattern.permute.xlu0 0
        %777 = vperm.xlu0 %776, %v743
        %v778 = vpop.permute.xlu0 %777
        %781 = vset.pattern.permute.xlu0 0
        %782 = vperm.xlu0 %781, %v744
        %v783 = vpop.permute.xlu0 %782
        %786 = vset.pattern.permute.xlu0 0
        %787 = vperm.xlu0 %786, %v745
        %v788 = vpop.permute.xlu0 %787
        %791 = vset.pattern.permute.xlu0 0
        %792 = vperm.xlu0 %791, %v746
        %v793 = vpop.permute.xlu0 %792
        %796 = vset.pattern.permute.xlu0 0
        %797 = vperm.xlu0 %796, %v747
        %v798 = vpop.permute.xlu0 %797
        %801 = vset.pattern.permute.xlu0 0
        %802 = vperm.xlu0 %801, %v748
        %v803 = vpop.permute.xlu0 %802
        %806 = vset.pattern.permute.xlu0 0
        %807 = vperm.xlu0 %806, %v749
        %v808 = vpop.permute.xlu0 %807
        %811 = vset.pattern.permute.xlu0 0
        %812 = vperm.xlu0 %811, %v750
        %v813 = vpop.permute.xlu0 %812
        %816 = vset.pattern.permute.xlu0 0
        %817 = vperm.xlu0 %816, %v751
        %v818 = vpop.permute.xlu0 %817
        %821 = vset.pattern.permute.xlu0 0
        %822 = vperm.xlu0 %821, %v752
        %v823 = vpop.permute.xlu0 %822
        %826 = vset.pattern.permute.xlu0 0
        %827 = vperm.xlu0 %826, %v753
        %v828 = vpop.permute.xlu0 %827
        %831 = vset.pattern.permute.xlu0 0
        %832 = vperm.xlu0 %831, %v754
        %v833 = vpop.permute.xlu0 %832
        %v835 = vmul.f32 %v677, %v758
        %v836 = vmul.f32 %v680, %v763
        %v837 = vmul.f32 %v685, %v768
        %v838 = vmul.f32 %v688, %v773
        %v839 = vmul.f32 %v693, %v778
        %v840 = vmul.f32 %v696, %v783
        %v841 = vmul.f32 %v701, %v788
        %v842 = vmul.f32 %v704, %v793
        %v843 = vmul.f32 %v709, %v798
        %v844 = vmul.f32 %v712, %v803
        %v845 = vmul.f32 %v717, %v808
        %v846 = vmul.f32 %v720, %v813
        %v847 = vmul.f32 %v725, %v818
        %v848 = vmul.f32 %v728, %v823
        %v849 = vmul.f32 %v733, %v828
        %v850 = vmul.f32 %v736, %v833
        %v852 = vlaneseq
        %v853 = vshrl.u32 %v852, 7
        %v854 = vsub.s32 0, %v853
        %v855 = vrot.slane %v629, %v854
        %v857 = vadd.f32 %v835, %v855
        %v858 = vadd.f32 %v836, %v855
        %v859 = vadd.f32 %v837, %v855
        %v860 = vadd.f32 %v838, %v855
        %v861 = vadd.f32 %v839, %v855
        %v862 = vadd.f32 %v840, %v855
        %v863 = vadd.f32 %v841, %v855
        %v864 = vadd.f32 %v842, %v855
        %v865 = vadd.f32 %v843, %v855
        %v866 = vadd.f32 %v844, %v855
        %v867 = vadd.f32 %v845, %v855
        %v868 = vadd.f32 %v846, %v855
        %v869 = vadd.f32 %v847, %v855
        %v870 = vadd.f32 %v848, %v855
        %v871 = vadd.f32 %v849, %v855
        %v872 = vadd.f32 %v850, %v855
        %v873 = vmul.f32 %v857, 0.2
        %v874 = vmul.f32 %v858, 0.2
        %v875 = vmul.f32 %v859, 0.2
        %v876 = vmul.f32 %v860, 0.2
        %v877 = vmul.f32 %v861, 0.2
        %v878 = vmul.f32 %v862, 0.2
        %v879 = vmul.f32 %v863, 0.2
        %v880 = vmul.f32 %v864, 0.2
        %v881 = vmul.f32 %v865, 0.2
        %v882 = vmul.f32 %v866, 0.2
        %v883 = vmul.f32 %v867, 0.2
        %v884 = vmul.f32 %v868, 0.2
        %v885 = vmul.f32 %v869, 0.2
        %v886 = vmul.f32 %v870, 0.2
        %v887 = vmul.f32 %v871, 0.2
        %v888 = vmul.f32 %v872, 0.2
        %v889 = vmax.f32 %v857, %v873
        %v890 = vmax.f32 %v858, %v874
        %v891 = vmax.f32 %v859, %v875
        %v892 = vmax.f32 %v860, %v876
        %v893 = vmax.f32 %v861, %v877
        %v894 = vmax.f32 %v862, %v878
        %v895 = vmax.f32 %v863, %v879
        %v896 = vmax.f32 %v864, %v880
        %v897 = vmax.f32 %v865, %v881
        %v898 = vmax.f32 %v866, %v882
        %v899 = vmax.f32 %v867, %v883
        %v900 = vmax.f32 %v868, %v884
        %v901 = vmax.f32 %v869, %v885
        %v902 = vmax.f32 %v870, %v886
        %v903 = vmax.f32 %v871, %v887
        %v904 = vmax.f32 %v872, %v888
        %905 = vst [vmem:[#allocation3] sm:$0xff] %v889
        %906 = vst [vmem:[#allocation3 + $0x8] sm:$0xff] %v890
        %907 = vst [vmem:[#allocation3 + $0x10] sm:$0xff] %v891
        %908 = vst [vmem:[#allocation3 + $0x18] sm:$0xff] %v892
        %909 = vst [vmem:[#allocation3 + $0x20] sm:$0xff] %v893
        %910 = vst [vmem:[#allocation3 + $0x28] sm:$0xff] %v894
        %911 = vst [vmem:[#allocation3 + $0x30] sm:$0xff] %v895
        %912 = vst [vmem:[#allocation3 + $0x38] sm:$0xff] %v896
        %913 = vst [vmem:[#allocation3 + $0x40] sm:$0xff] %v897
        %914 = vst [vmem:[#allocation3 + $0x48] sm:$0xff] %v898
        %915 = vst [vmem:[#allocation3 + $0x50] sm:$0xff] %v899
        %916 = vst [vmem:[#allocation3 + $0x58] sm:$0xff] %v900
        %917 = vst [vmem:[#allocation3 + $0x60] sm:$0xff] %v901
        %918 = vst [vmem:[#allocation3 + $0x68] sm:$0xff] %v902
        %919 = vst [vmem:[#allocation3 + $0x70] sm:$0xff] %v903
        %920 = vst [vmem:[#allocation3 + $0x78] sm:$0xff] %v904
        %p921 = scmp.eq.s32.totalorder %s20, 2
        // Predicated region
        $region80: #{tpu_custom_call.1} parent=35 // pred_check
          %p922 = pneg %p921
        $region81: #{tpu_custom_call.1} parent=35 // pred_check_branch
          %924 = sbr.rel (%p922) target = $region83
        $region82: #{tpu_custom_call.1} parent=35 // pred_region
          %v925 = vld [vmem:[#allocation3] sm:$0xff]
          %v926 = vld [vmem:[#allocation3 + $0x8] sm:$0xff]
          %v927 = vld [vmem:[#allocation3 + $0x10] sm:$0xff]
          %v928 = vld [vmem:[#allocation3 + $0x18] sm:$0xff]
          %v929 = vld [vmem:[#allocation3 + $0x20] sm:$0xff]
          %v930 = vld [vmem:[#allocation3 + $0x28] sm:$0xff]
          %v931 = vld [vmem:[#allocation3 + $0x30] sm:$0xff]
          %v932 = vld [vmem:[#allocation3 + $0x38] sm:$0xff]
          %v933 = vld [vmem:[#allocation3 + $0x40] sm:$0xff]
          %v934 = vld [vmem:[#allocation3 + $0x48] sm:$0xff]
          %v935 = vld [vmem:[#allocation3 + $0x50] sm:$0xff]
          %v936 = vld [vmem:[#allocation3 + $0x58] sm:$0xff]
          %v937 = vld [vmem:[#allocation3 + $0x60] sm:$0xff]
          %v938 = vld [vmem:[#allocation3 + $0x68] sm:$0xff]
          %v939 = vld [vmem:[#allocation3 + $0x70] sm:$0xff]
          %v940 = vld [vmem:[#allocation3 + $0x78] sm:$0xff]
          %941 = vst [vmem:[#allocation7] sm:$0xff] %v925
          %942 = vst [vmem:[#allocation7 + $0x8] sm:$0xff] %v926
          %943 = vst [vmem:[#allocation7 + $0x10] sm:$0xff] %v927
          %944 = vst [vmem:[#allocation7 + $0x18] sm:$0xff] %v928
          %945 = vst [vmem:[#allocation7 + $0x20] sm:$0xff] %v929
          %946 = vst [vmem:[#allocation7 + $0x28] sm:$0xff] %v930
          %947 = vst [vmem:[#allocation7 + $0x30] sm:$0xff] %v931
          %948 = vst [vmem:[#allocation7 + $0x38] sm:$0xff] %v932
          %949 = vst [vmem:[#allocation7 + $0x40] sm:$0xff] %v933
          %950 = vst [vmem:[#allocation7 + $0x48] sm:$0xff] %v934
          %951 = vst [vmem:[#allocation7 + $0x50] sm:$0xff] %v935
          %952 = vst [vmem:[#allocation7 + $0x58] sm:$0xff] %v936
          %953 = vst [vmem:[#allocation7 + $0x60] sm:$0xff] %v937
          %954 = vst [vmem:[#allocation7 + $0x68] sm:$0xff] %v938
          %955 = vst [vmem:[#allocation7 + $0x70] sm:$0xff] %v939
          %956 = vst [vmem:[#allocation7 + $0x78] sm:$0xff] %v940
        $region83: #{tpu_custom_call.1} parent=35 // pred_fallthru
          _
        // Predicated region
        $region84: #{tpu_custom_call.1} parent=35 // pred_check
          %p957 = pneg %p127
        $region85: #{tpu_custom_call.1} parent=35 // pred_check_branch
          %959 = sbr.rel (%p957) target = $region87
        $region86: #{tpu_custom_call.1} parent=35 // pred_region
          %s961 = ssub.s32 2048, 2048
          %962 = vsyncadd [#allocation6], %s961
          %s963 = sshll.u32 [#allocation7], 4
          %s964 = int_to_ptr.vmem [resolvable:$true] %s963
          %969 = dma.vmem_to_hbm [thread:$0]  %s964, 2048, %s5, [#allocation6], 128, 128, 8
        $region87: #{tpu_custom_call.1} parent=35 // pred_fallthru
          _
        // Predicated region
        $region88: #{tpu_custom_call.1} parent=35 // pred_check
          %p970 = pneg %p127
        $region89: #{tpu_custom_call.1} parent=35 // pred_check_branch
          %972 = sbr.rel (%p970) target = $region91
        $region90: #{tpu_custom_call.1} parent=35 // pred_region
          %973 = dma.done [#allocation6], 2048
        $region91: #{tpu_custom_call.1} parent=35 // pred_fallthru
          _
      $region36: #{tpu_custom_call.1} parent=5 // pred_fallthru
        _
      %p974 = scmp.le.s32.totalorder 2, %s15
      // Predicated region
      $region92: #{tpu_custom_call.1} parent=5 // pred_check
        %p975 = pneg %p974
      $region93: #{tpu_custom_call.1} parent=5 // pred_check_branch
        %977 = sbr.rel (%p975) target = $region95
      $region94: #{tpu_custom_call.1} parent=5 // pred_region
        %s978 = ssub.s32 %s15, 2
      $region95: #{tpu_custom_call.1} parent=5 // pred_fallthru
        _
    $region6: #{tpu_custom_call.1} parent=1 // loop_footer
      %s19 = sadd.s32 1, %s15
    $region7: #{tpu_custom_call.1} parent=1 // loop_footer_branch
      %14 = sbr.rel target = $region3
    $region8: #{tpu_custom_call.1} parent=1 // loop_exit
      _
    %979 = vsyncpa [#allocation5], 1
    %s980 = scalar_lea.sflag [#allocation5], 1
    %981 = vsyncpa %s980, 1
    %982 = vsyncpa [#allocation6], 1
    %s983 = scalar_lea.sflag [#allocation6], 1
    %984 = vsyncpa %s983, 1

</llo_original>
